<compile_context>
chip_gen: v7x
topology: tpu7x:2x2x1
jax: 0.10.0
libtpu: 0.0.40
codegen_flags: <defaults>
</compile_context>

<pallas_src>
import jax
import jax.numpy as jnp
from jax.experimental import pallas as pl
from jax.experimental.pallas import tpu as pltpu

BN_EPS = 1e-5
LANE = 128
SUBLANE_BF16 = 16                 # bf16 sublane tile; K and block_m stay multiples of it
VMEM_FLOOR = 32 * 1024 * 1024
VMEM_CEIL = 48 * 1024 * 1024      # safe scoped budget even on v7x (64 MiB physical)


def _round_up(v, m):
    return ((v + m - 1) // m) * m


def conv_stats_kernel(p_ref, w_ref, sum_ref, sq_ref):
    """Pass 1 (stats only): conv matmul for this M-block, emit per-block partial
    per-channel sum / sum-of-squares.  No y writeback (y is recomputed in pass 2).

    p_ref:   [TM, K_pad]    bf16 im2col patches (rows >= M are zero)
    w_ref:   [K_pad, C_pad] bf16 reshaped conv weight (padded cols are zero)
    sum_ref: [1, 1, C_pad]  f32 partial per-channel sum for this block
    sq_ref:  [1, 1, C_pad]  f32 partial per-channel sum of squares for this block
    """
    y = jnp.dot(p_ref[...], w_ref[...], preferred_element_type=jnp.float32)
    sum_ref[...] = jnp.sum(y, axis=0, keepdims=True).reshape(sum_ref.shape)
    sq_ref[...] = jnp.sum(y * y, axis=0, keepdims=True).reshape(sq_ref.shape)


def conv_bn_relu_kernel(p_ref, w_ref, scale_ref, shift_ref, o_ref):
    """Pass 2 (fused): recompute the conv matmul, apply folded BN (one FMA per element)
    + ReLU, store bf16 with lane-dense (128-multiple) writes."""
    y = jnp.dot(p_ref[...], w_ref[...], preferred_element_type=jnp.float32)
    z = y * scale_ref[...] + shift_ref[...]
    o_ref[...] = jnp.maximum(z, 0.0).astype(o_ref.dtype)


def _im2col_nhwc(x_nhwc, kh, kw):
    # stride=1, padding=0 (nn.Conv2d defaults). [N,H,W,C] -> [N*OH*OW, kh*kw*C]
    N, H, W, C = x_nhwc.shape
    OH, OW = H - kh + 1, W - kw + 1
    cols = []
    for i in range(kh):
        for j in range(kw):
            cols.append(x_nhwc[:, i:i + OH, j:j + OW, :])   # [N, OH, OW, C]
    p = jnp.stack(cols, axis=3)                             # [N, OH, OW, kh*kw, C]
    return p.reshape(N * OH * OW, kh * kw * C), OH, OW


def _pick_block_m(M, target=1024):
    # Big row blocks (>=512 rows measured at ~85% of HBM roofline vs ~63% at 256) but
    # keep the "parallel" M grid >= 2 steps so both v7x TensorCores get work.
    if M >= 2 * target:
        return target
    bm = _round_up(max(-(-M // 2), SUBLANE_BF16), SUBLANE_BF16)
    return min(bm, target)


def _vmem_limit_bytes(block_m, k_pad, c_pad):
    # Double-buffered streaming tiles (bf16) + the in-kernel f32 matmul intermediate,
    # with generous slack; clamped so the request is valid on every generation.
    step = (2 * block_m * k_pad * 2      # patches (double-buffered, bf16)
            + 2 * k_pad * c_pad * 2      # weight
            + 2 * block_m * c_pad * 2    # bf16 output tiles
            + 2 * block_m * c_pad * 4)   # f32 matmul intermediate / reductions
    return int(min(max(4 * step, VMEM_FLOOR), VMEM_CEIL))


@jax.jit
def conv_block_forward(x_nchw, conv_w, conv_b, bn_gamma, bn_beta):
    """ConvBlock forward (training-mode BatchNorm with batch statistics).

    x_nchw:   [N, Cin, H, W]
    conv_w:   [Cout, Cin, kh, kw]   (PyTorch Conv2d weight layout)
    conv_b:   [Cout]  (cancels exactly under training-mode BN; unused)
    bn_gamma: [Cout]
    bn_beta:  [Cout]
    returns:  [N, Cout, OH, OW] float32
    """
    del conv_b  # a bias added before training-mode BatchNorm cancels exactly in (y - mean)

    N, Cin, H, W = x_nchw.shape
    Cout, _, kh, kw = conv_w.shape
    OH, OW = H - kh + 1, W - kw + 1
    M = N * OH * OW
    K = kh * kw * Cin

    K_pad = _round_up(K, SUBLANE_BF16)        # sublane-aligned only; NOT lane-padded to 128
    C_pad = _round_up(Cout, LANE)             # lane-dense outputs / MXU columns
    block_m = _pick_block_m(M)
    M_pad = _round_up(M, block_m)
    G = M_pad // block_m
    vmem_limit = _vmem_limit_bytes(block_m, K_pad, C_pad)

    # Early bf16 cast: halves the bytes moved by the whole XLA transpose/im2col chain.
    # TODO(synk): form patches in-kernel from halo'd x tiles to remove the kh*kw HBM
    # amplification of the materialized im2col entirely (biggest residual cost on v5e).
    x_nhwc = jnp.transpose(x_nchw.astype(jnp.bfloat16), (0, 2, 3, 1))
    patches, _, _ = _im2col_nhwc(x_nhwc, kh, kw)                   # [M, K] bf16
    patches = jnp.pad(patches, ((0, M_pad - M), (0, K_pad - K)))   # [M_pad, K_pad] bf16

    # [kh, kw, Cin, Cout] ordering matches the patch (i, j, c) ordering.
    w_mat = jnp.transpose(conv_w, (2, 3, 1, 0)).reshape(K, Cout)
    w_mat = jnp.pad(w_mat.astype(jnp.bfloat16),
                    ((0, K_pad - K), (0, C_pad - Cout)))           # [K_pad, C_pad] bf16

    # --- Pass 1: stats only ("parallel" over M blocks; no y writeback) ---
    # TODO(synk): add a K grid axis ("arbitrary" + f32 VMEM accumulator with pl.when
    # init/finalize) once the full-K weight/patch blocks approach the v7x VMEM budget.
    psum, psq = pl.pallas_call(
        conv_stats_kernel,
        out_shape=(
            jax.ShapeDtypeStruct((G, 1, C_pad), jnp.float32),
            jax.ShapeDtypeStruct((G, 1, C_pad), jnp.float32),
        ),
        grid_spec=pltpu.PrefetchScalarGridSpec(
            num_scalar_prefetch=0,
            grid=(G,),
            in_specs=[
                pl.BlockSpec((block_m, K_pad), lambda i: (i, 0)),
                pl.BlockSpec((K_pad, C_pad), lambda i: (0, 0)),
            ],
            out_specs=[
                pl.BlockSpec((1, 1, C_pad), lambda i: (i, 0, 0)),
                pl.BlockSpec((1, 1, C_pad), lambda i: (i, 0, 0)),
            ],
        ),
        compiler_params=pltpu.CompilerParams(
            dimension_semantics=("parallel",),
            vmem_limit_bytes=vmem_limit,
        ),
    )(patches, w_mat)

    # --- Tiny JAX epilogue: global batch stats -> folded per-channel scale/shift.
    # Zero-padded rows/channels contribute exactly 0 to both sums -> divide by true M.
    sums = jnp.sum(psum[:, 0, :], axis=0)                     # [C_pad]
    sqs = jnp.sum(psq[:, 0, :], axis=0)                       # [C_pad]
    mean = sums / M
    var = jnp.maximum(sqs / M - mean * mean, 0.0)             # biased var (PyTorch train mode)
    gamma = jnp.pad(bn_gamma.astype(jnp.float32), (0, C_pad - Cout))
    beta = jnp.pad(bn_beta.astype(jnp.float32), (0, C_pad - Cout))
    scale = gamma * jax.lax.rsqrt(var + BN_EPS)
    shift = beta - mean * scale
    scale_row = scale.reshape(1, C_pad)
    shift_row = shift.reshape(1, C_pad)

    # --- Pass 2: fused conv-recompute + folded BN + ReLU, bf16 lane-dense stores ---
    out_flat = pl.pallas_call(
        conv_bn_relu_kernel,
        out_shape=jax.ShapeDtypeStruct((M_pad, C_pad), jnp.bfloat16),
        grid_spec=pltpu.PrefetchScalarGridSpec(
            num_scalar_prefetch=0,
            grid=(G,),
            in_specs=[
                pl.BlockSpec((block_m, K_pad), lambda i: (i, 0)),
                pl.BlockSpec((K_pad, C_pad), lambda i: (0, 0)),
                pl.BlockSpec((1, C_pad), lambda i: (0, 0)),
                pl.BlockSpec((1, C_pad), lambda i: (0, 0)),
            ],
            out_specs=pl.BlockSpec((block_m, C_pad), lambda i: (i, 0)),
        ),
        compiler_params=pltpu.CompilerParams(
            dimension_semantics=("parallel",),
            vmem_limit_bytes=vmem_limit,
        ),
    )(patches, w_mat, scale_row, shift_row)

    # Slice / reshape / transpose stay in bf16 (half the bytes); the final f32 cast fuses
    # into the transpose copy.
    out_nhwc = out_flat[:M, :Cout].reshape(N, OH, OW, Cout)
    # TODO(synk): keep NHWC downstream to drop this final layout transpose entirely.
    return jnp.transpose(out_nhwc, (0, 3, 1, 2)).astype(jnp.float32)   # NCHW


def _reference(x, w, b, gamma, beta):
    """Pure-JAX f32 reference of the PyTorch ConvBlock forward (training-mode BN)."""
    y = jax.lax.conv_general_dilated(
        x, w, window_strides=(1, 1), padding="VALID",
        dimension_numbers=("NCHW", "OIHW", "NCHW"))
    y = y + b.reshape(1, -1, 1, 1)
    mean = jnp.mean(y, axis=(0, 2, 3), keepdims=True)
    var = jnp.mean((y - mean) ** 2, axis=(0, 2, 3), keepdims=True)
    yhat = (y - mean) * jax.lax.rsqrt(var + BN_EPS)
    z = gamma.reshape(1, -1, 1, 1) * yhat + beta.reshape(1, -1, 1, 1)
    return jnp.maximum(z, 0.0)


if __name__ == "__main__":
    # Small shapes consistent with the module: ConvBlock(4, 8, 3)
    N, Cin, H, W = 2, 4, 16, 16
    Cout, kh, kw = 8, 3, 3

    key = jax.random.PRNGKey(0)
    k_x, k_w, k_b, k_g, k_beta = jax.random.split(key, 5)

    x = jax.random.normal(k_x, (N, Cin, H, W), dtype=jnp.float32)

    # Deterministic synthetic parameters (PyTorch-like fan-in scaling for conv).
    fan_in = Cin * kh * kw
    bound = 1.0 / (fan_in ** 0.5)
    conv_w = jax.random.uniform(k_w, (Cout, Cin, kh, kw), jnp.float32, -bound, bound)
    conv_b = jax.random.uniform(k_b, (Cout,), jnp.float32, -bound, bound)
    bn_gamma = 1.0 + 0.1 * jax.random.normal(k_g, (Cout,), jnp.float32)
    bn_beta = 0.1 * jax.random.normal(k_beta, (Cout,), jnp.float32)

    out = conv_block_forward(x, conv_w, conv_b, bn_gamma, bn_beta)
    jax.block_until_ready(out)

    assert out.shape == (N, Cout, H - kh + 1, W - kw + 1), out.shape
    assert bool(jnp.all(jnp.isfinite(out))), "non-finite output"
    assert bool(jnp.all(out >= 0.0)), "ReLU output must be non-negative"

    ref = _reference(x, conv_w, conv_b, bn_gamma, bn_beta)
    max_err = float(jnp.max(jnp.abs(out - ref)))
    assert max_err < 8e-2, f"max abs error vs f32 reference too large: {max_err}"
    print("KERNEL_OK")
</pallas_src>

<mosaic_0001>
module attributes {stable_mosaic.version = 11 : i64} {
  func.func @conv_stats_kernel(%arg0: i32, %arg1: memref<208x48xbf16, #tpu.memory_space<vmem>>, %arg2: memref<48x128xbf16, #tpu.memory_space<vmem>>, %arg3: memref<1x1x128xf32, #tpu.memory_space<vmem>>, %arg4: memref<1x1x128xf32, #tpu.memory_space<vmem>>) attributes {dimension_semantics = [#tpu.dimension_semantics<parallel>], iteration_bounds = array<i64: 2>, scalar_prefetch = 0 : i64, scratch_operands = 0 : i64, tpu.core_type = #tpu.core_type<tc>, window_params = [{transform_indices = @transform_0, window_bounds = array<i64: 208, 48>}, {pipeline_mode = #tpu.pipeline_mode<synchronous>, transform_indices = @transform_1, window_bounds = array<i64: 48, 128>}, {transform_indices = @transform_2, window_bounds = array<i64: 1, 1, 128>}, {transform_indices = @transform_3, window_bounds = array<i64: 1, 1, 128>}]} {
    %c0 = arith.constant 0 : index
    %c0_0 = arith.constant 0 : index
    %0 = vector.load %arg1[%c0, %c0_0] : memref<208x48xbf16, #tpu.memory_space<vmem>>, vector<208x48xbf16>
    %c0_1 = arith.constant 0 : index
    %c0_2 = arith.constant 0 : index
    %1 = vector.load %arg2[%c0_1, %c0_2] : memref<48x128xbf16, #tpu.memory_space<vmem>>, vector<48x128xbf16>
    %cst = arith.constant dense<0.000000e+00> : vector<208x128xf32>
    %2 = tpu.matmul %0, %1, %cst {dimension_numbers = #tpu.dot_dimension_numbers<[1], [0], [0], [1], [0, 0, 1, 1], [], []>} : vector<208x48xbf16>, vector<48x128xbf16>, vector<208x128xf32> -> vector<208x128xf32>
    %cst_3 = arith.constant dense<0.000000e+00> : vector<128xf32>
    %3 = vector.multi_reduction <add>, %2, %cst_3 [0] : vector<208x128xf32> to vector<128xf32>
    %4 = vector.shape_cast %3 : vector<128xf32> to vector<1x128xf32>
    %5 = vector.shape_cast %4 : vector<1x128xf32> to vector<1x1x128xf32>
    %c0_4 = arith.constant 0 : index
    %c0_5 = arith.constant 0 : index
    %c0_6 = arith.constant 0 : index
    %6 = vector.load %arg3[%c0_4, %c0_5, %c0_6] : memref<1x1x128xf32, #tpu.memory_space<vmem>>, vector<1x1x128xf32>
    tpu.vector_store %arg3[%c0_4, %c0_5, %c0_6], %5 {strides = array<i32>} : memref<1x1x128xf32, #tpu.memory_space<vmem>>, vector<1x1x128xf32>,
    %7 = arith.mulf %2, %2 : vector<208x128xf32>
    %cst_7 = arith.constant dense<0.000000e+00> : vector<128xf32>
    %8 = vector.multi_reduction <add>, %7, %cst_7 [0] : vector<208x128xf32> to vector<128xf32>
    %9 = vector.shape_cast %8 : vector<128xf32> to vector<1x128xf32>
    %10 = vector.shape_cast %9 : vector<1x128xf32> to vector<1x1x128xf32>
    %c0_8 = arith.constant 0 : index
    %c0_9 = arith.constant 0 : index
    %c0_10 = arith.constant 0 : index
    %11 = vector.load %arg4[%c0_8, %c0_9, %c0_10] : memref<1x1x128xf32, #tpu.memory_space<vmem>>, vector<1x1x128xf32>
    tpu.vector_store %arg4[%c0_8, %c0_9, %c0_10], %10 {strides = array<i32>} : memref<1x1x128xf32, #tpu.memory_space<vmem>>, vector<1x1x128xf32>,
    return
  }
  func.func @transform_0(%arg0: i32) -> (i32, i32) {
    %c0_i32 = arith.constant 0 : i32
    %c0_i32_0 = arith.constant 0 : i32
    return %arg0, %c0_i32 : i32, i32
  }
  func.func @transform_1(%arg0: i32) -> (i32, i32) {
    %c0_i32 = arith.constant 0 : i32
    %c0_i32_0 = arith.constant 0 : i32
    %c0_i32_1 = arith.constant 0 : i32
    return %c0_i32, %c0_i32_0 : i32, i32
  }
  func.func @transform_2(%arg0: i32) -> (i32, i32, i32) {
    %c0_i32 = arith.constant 0 : i32
    %c0_i32_0 = arith.constant 0 : i32
    %c0_i32_1 = arith.constant 0 : i32
    return %arg0, %c0_i32, %c0_i32_0 : i32, i32, i32
  }
  func.func @transform_3(%arg0: i32) -> (i32, i32, i32) {
    %c0_i32 = arith.constant 0 : i32
    %c0_i32_0 = arith.constant 0 : i32
    %c0_i32_1 = arith.constant 0 : i32
    return %arg0, %c0_i32, %c0_i32_0 : i32, i32, i32
  }
}

module attributes {stable_mosaic.version = 11 : i64} {
  func.func @conv_bn_relu_kernel(%arg0: i32, %arg1: memref<208x48xbf16, #tpu.memory_space<vmem>>, %arg2: memref<48x128xbf16, #tpu.memory_space<vmem>>, %arg3: memref<1x128xf32, #tpu.memory_space<vmem>>, %arg4: memref<1x128xf32, #tpu.memory_space<vmem>>, %arg5: memref<208x128xbf16, #tpu.memory_space<vmem>>) attributes {dimension_semantics = [#tpu.dimension_semantics<parallel>], iteration_bounds = array<i64: 2>, scalar_prefetch = 0 : i64, scratch_operands = 0 : i64, tpu.core_type = #tpu.core_type<tc>, window_params = [{transform_indices = @transform_0, window_bounds = array<i64: 208, 48>}, {pipeline_mode = #tpu.pipeline_mode<synchronous>, transform_indices = @transform_1, window_bounds = array<i64: 48, 128>}, {pipeline_mode = #tpu.pipeline_mode<synchronous>, transform_indices = @transform_2, window_bounds = array<i64: 1, 128>}, {pipeline_mode = #tpu.pipeline_mode<synchronous>, transform_indices = @transform_3, window_bounds = array<i64: 1, 128>}, {transform_indices = @transform_4, window_bounds = array<i64: 208, 128>}]} {
    %c0 = arith.constant 0 : index
    %c0_0 = arith.constant 0 : index
    %0 = vector.load %arg1[%c0, %c0_0] : memref<208x48xbf16, #tpu.memory_space<vmem>>, vector<208x48xbf16>
    %c0_1 = arith.constant 0 : index
    %c0_2 = arith.constant 0 : index
    %1 = vector.load %arg2[%c0_1, %c0_2] : memref<48x128xbf16, #tpu.memory_space<vmem>>, vector<48x128xbf16>
    %cst = arith.constant dense<0.000000e+00> : vector<208x128xf32>
    %2 = tpu.matmul %0, %1, %cst {dimension_numbers = #tpu.dot_dimension_numbers<[1], [0], [0], [1], [0, 0, 1, 1], [], []>} : vector<208x48xbf16>, vector<48x128xbf16>, vector<208x128xf32> -> vector<208x128xf32>
    %c0_3 = arith.constant 0 : index
    %c0_4 = arith.constant 0 : index
    %3 = vector.load %arg3[%c0_3, %c0_4] : memref<1x128xf32, #tpu.memory_space<vmem>>, vector<1x128xf32>
    %4 = vector.broadcast %3 : vector<1x128xf32> to vector<208x128xf32>
    %5 = arith.mulf %2, %4 : vector<208x128xf32>
    %c0_5 = arith.constant 0 : index
    %c0_6 = arith.constant 0 : index
    %6 = vector.load %arg4[%c0_5, %c0_6] : memref<1x128xf32, #tpu.memory_space<vmem>>, vector<1x128xf32>
    %7 = vector.broadcast %6 : vector<1x128xf32> to vector<208x128xf32>
    %8 = arith.addf %5, %7 : vector<208x128xf32>
    %cst_7 = arith.constant 0.000000e+00 : f32
    %9 = vector.broadcast %cst_7 : f32 to vector<208x128xf32>
    %10 = arith.maximumf %8, %9 : vector<208x128xf32>
    %11 = arith.truncf %10 : vector<208x128xf32> to vector<208x128xbf16>
    %c0_8 = arith.constant 0 : index
    %c0_9 = arith.constant 0 : index
    %12 = vector.load %arg5[%c0_8, %c0_9] : memref<208x128xbf16, #tpu.memory_space<vmem>>, vector<208x128xbf16>
    tpu.vector_store %arg5[%c0_8, %c0_9], %11 {strides = array<i32>} : memref<208x128xbf16, #tpu.memory_space<vmem>>, vector<208x128xbf16>,
    return
  }
  func.func @transform_0(%arg0: i32) -> (i32, i32) {
    %c0_i32 = arith.constant 0 : i32
    %c0_i32_0 = arith.constant 0 : i32
    return %arg0, %c0_i32 : i32, i32
  }
  func.func @transform_1(%arg0: i32) -> (i32, i32) {
    %c0_i32 = arith.constant 0 : i32
    %c0_i32_0 = arith.constant 0 : i32
    %c0_i32_1 = arith.constant 0 : i32
    return %c0_i32, %c0_i32_0 : i32, i32
  }
  func.func @transform_2(%arg0: i32) -> (i32, i32) {
    %c0_i32 = arith.constant 0 : i32
    %c0_i32_0 = arith.constant 0 : i32
    %c0_i32_1 = arith.constant 0 : i32
    return %c0_i32, %c0_i32_0 : i32, i32
  }
  func.func @transform_3(%arg0: i32) -> (i32, i32) {
    %c0_i32 = arith.constant 0 : i32
    %c0_i32_0 = arith.constant 0 : i32
    %c0_i32_1 = arith.constant 0 : i32
    return %c0_i32, %c0_i32_0 : i32, i32
  }
  func.func @transform_4(%arg0: i32) -> (i32, i32) {
    %c0_i32 = arith.constant 0 : i32
    %c0_i32_0 = arith.constant 0 : i32
    return %arg0, %c0_i32 : i32, i32
  }
}

</mosaic_0001>

<llo_original>
// kernel: conv_block_forward.2
$region0: #{conv_block_forward.2}
  #allocation0 [shape = 'u32[]', space=smem, size = 0x4, offset = 0x4, fixed_abs, tag = 'smem constant byte address 0x4 - core index']
  #allocation1 [shape = 'u32[144,128]{1,0:T(1,128)}', space=vmem, size = 0x12000, scoped, tag = 'internal scratch']
  %s0 = inlined_call_operand.vmem [shape: bf16[416,48], index: 0, kind: input, shape index: {}]
  %s1 = inlined_call_operand.vmem [shape: bf16[48,128], index: 1, kind: input, shape index: {}]
  %s2 = inlined_call_operand.vmem [shape: f32[2,1,128], index: 2, kind: output, shape index: {0}]
  %s3 = inlined_call_operand.vmem [shape: f32[2,1,128], index: 3, kind: output, shape index: {1}]
  %4 = xla_tuple %s2, %s3
  %s5 = sld [smem:[#allocation0]]
  $region49: #{conv_block_forward.2} parent=0
    _
  %s7 = ssub.s32 1, %s5
  %s8 = scalar_select 0, %s7, %s5
  loop: start=0, step=1, limit=4
  $region2: #{conv_block_forward.2} parent=0 // loop_pre_header
    _
  $region3: #{conv_block_forward.2} parent=0 // loop_header
    %s10 = sphi 0, %s14
    %p11 = scmp.ge.s32.totalorder %s10, 4
    %s20 = sphi 0, %s22
    %s23 = sphi 0, %s20
    %s24 = sphi 0, %s23
    %s40 = sphi 0, %s24
    %s44 = sphi 0, %s44
    %s46 = sphi 0, %s44
    %s47 = sphi 0, %s46
    %s61 = sphi 0, %s47
    %s67 = sphi 0, %s69
    %s70 = sphi 0, %s67
    %s71 = sphi 0, %s70
    %s87 = sphi 0, %s71
    %s93 = sphi 0, %s95
    %s96 = sphi 0, %s93
    %s97 = sphi 0, %s96
    %s113 = sphi 0, %s97
  $region4: #{conv_block_forward.2} parent=0 // loop_header_branch
    %13 = sbr.rel (%p11) target = $region8
  $region5: #{conv_block_forward.2} parent=0 // loop_body
    %s15 = ssub.s32 %s10, 1
    %s16 = ssub.s32 %s10, 2
    %s17 = sadd.s32 %s10, 1
    %s18 = ssub.s32 %s10, %s17
    %p19 = scmp.eq.s32.totalorder %s18, 0
    %s21 = sadd.s32 %s20, 1
    %s22 = scalar_select %p19, %s20, %s21
    %p25 = pneg %p19
    %p26 = scmp.eq.s32.totalorder %s10, 1
    %p27 = por %p25, %p26
    %p28 = scmp.ne.s32.totalorder %s20, %s23
    %p29 = scmp.eq.s32.totalorder %s10, 0
    %p30 = por %p28, %p29
    %p31 = scmp.ne.s32.totalorder %s20, %s23
    %p32 = scmp.eq.s32.totalorder %s15, 1
    %p33 = por %p31, %p32
    %p34 = scmp.ne.s32.totalorder %s23, %s24
    %p35 = scmp.eq.s32.totalorder %s15, 0
    %p36 = por %p34, %p35
    %p37 = scmp.ne.s32.totalorder %s23, %s24
    %p38 = scmp.eq.s32.totalorder %s16, 1
    %p39 = por %p37, %p38
    %p41 = scmp.ne.s32.totalorder %s24, %s40
    %p42 = scmp.eq.s32.totalorder %s16, 0
    %p43 = por %p41, %p42
    %s45 = sadd.s32 %s44, 1
    %p48 = scmp.eq.s32.totalorder %s10, 1
    %p49 = scmp.ne.s32.totalorder %s44, %s46
    %p50 = scmp.eq.s32.totalorder %s10, 0
    %p51 = por %p49, %p50
    %p52 = scmp.ne.s32.totalorder %s44, %s46
    %p53 = scmp.eq.s32.totalorder %s15, 1
    %p54 = por %p52, %p53
    %p55 = scmp.ne.s32.totalorder %s46, %s47
    %p56 = scmp.eq.s32.totalorder %s15, 0
    %p57 = por %p55, %p56
    %p58 = scmp.ne.s32.totalorder %s46, %s47
    %p59 = scmp.eq.s32.totalorder %s16, 1
    %p60 = por %p58, %p59
    %p62 = scmp.ne.s32.totalorder %s47, %s61
    %p63 = scmp.eq.s32.totalorder %s16, 0
    %p64 = por %p62, %p63
    %s65 = ssub.s32 %s10, %s17
    %p66 = scmp.eq.s32.totalorder %s65, 0
    %s68 = sadd.s32 %s67, 1
    %s69 = scalar_select %p66, %s67, %s68
    %p72 = pneg %p66
    %p73 = scmp.eq.s32.totalorder %s10, 1
    %p74 = por %p72, %p73
    %p75 = scmp.ne.s32.totalorder %s67, %s70
    %p76 = scmp.eq.s32.totalorder %s10, 0
    %p77 = por %p75, %p76
    %p78 = scmp.ne.s32.totalorder %s67, %s70
    %p79 = scmp.eq.s32.totalorder %s15, 1
    %p80 = por %p78, %p79
    %p81 = scmp.ne.s32.totalorder %s70, %s71
    %p82 = scmp.eq.s32.totalorder %s15, 0
    %p83 = por %p81, %p82
    %p84 = scmp.ne.s32.totalorder %s70, %s71
    %p85 = scmp.eq.s32.totalorder %s16, 1
    %p86 = por %p84, %p85
    %p88 = scmp.ne.s32.totalorder %s71, %s87
    %p89 = scmp.eq.s32.totalorder %s16, 0
    %p90 = por %p88, %p89
    %s91 = ssub.s32 %s10, %s17
    %p92 = scmp.eq.s32.totalorder %s91, 0
    %s94 = sadd.s32 %s93, 1
    %s95 = scalar_select %p92, %s93, %s94
    %p98 = pneg %p92
    %p99 = scmp.eq.s32.totalorder %s10, 1
    %p100 = por %p98, %p99
    %p101 = scmp.ne.s32.totalorder %s93, %s96
    %p102 = scmp.eq.s32.totalorder %s10, 0
    %p103 = por %p101, %p102
    %p104 = scmp.ne.s32.totalorder %s93, %s96
    %p105 = scmp.eq.s32.totalorder %s15, 1
    %p106 = por %p104, %p105
    %p107 = scmp.ne.s32.totalorder %s96, %s97
    %p108 = scmp.eq.s32.totalorder %s15, 0
    %p109 = por %p107, %p108
    %p110 = scmp.ne.s32.totalorder %s96, %s97
    %p111 = scmp.eq.s32.totalorder %s16, 1
    %p112 = por %p110, %p111
    %p114 = scmp.ne.s32.totalorder %s97, %s113
    %p115 = scmp.eq.s32.totalorder %s16, 0
    %p116 = por %p114, %p115
    %p117 = scmp.le.s32.totalorder 1, %s10
    %p118 = scmp.lt.s32.totalorder %s10, 3
    %p119 = pnand %p117, %p118
    %p120 = pneg %p119
    // Predicated region
    $region9: #{conv_block_forward.2} parent=5 // pred_check
      _
    $region10: #{conv_block_forward.2} parent=5 // pred_check_branch
      %122 = sbr.rel (%p119) target = $region12
    $region11: #{conv_block_forward.2} parent=5 // pred_region
      %s123 = ssub.s32 %s10, 1
      // Predicated region
      $region13: #{conv_block_forward.2} parent=11 // pred_check
        %p124 = pneg %p57
      $region14: #{conv_block_forward.2} parent=11 // pred_check_branch
        %126 = sbr.rel (%p124) target = $region16
      $region15: #{conv_block_forward.2} parent=11 // pred_region
        _
      $region16: #{conv_block_forward.2} parent=11 // pred_fallthru
        _
    $region12: #{conv_block_forward.2} parent=5 // pred_fallthru
      _
    %p127 = scmp.lt.s32.totalorder %s10, 2
    // Predicated region
    $region17: #{conv_block_forward.2} parent=5 // pred_check
      %p128 = pneg %p127
    $region18: #{conv_block_forward.2} parent=5 // pred_check_branch
      %130 = sbr.rel (%p128) target = $region20
    $region19: #{conv_block_forward.2} parent=5 // pred_region
      // Predicated region
      $region21: #{conv_block_forward.2} parent=19 // pred_check
        %p131 = pneg %p30
      $region22: #{conv_block_forward.2} parent=19 // pred_check_branch
        %133 = sbr.rel (%p131) target = $region24
      $region23: #{conv_block_forward.2} parent=19 // pred_region
        %s134 = smul.u32 26, %s10
        %p135 = scmp.lt.s32.totalorder %s134, 51
        %s136 = scalar_select %p135, %s134, 51
        %s137 = smul.addr %s136, 4
        %s138 = scalar_lea.vmem %s0, %s137
        %s139 = smul.u32 26, %s10
      $region24: #{conv_block_forward.2} parent=19 // pred_fallthru
        _
    $region20: #{conv_block_forward.2} parent=5 // pred_fallthru
      _
    %p140 = scmp.le.s32.totalorder 1, %s10
    %p141 = scmp.lt.s32.totalorder %s10, 3
    %p142 = pnand %p140, %p141
    %p143 = pneg %p142
    // Predicated region
    $region25: #{conv_block_forward.2} parent=5 // pred_check
      _
    $region26: #{conv_block_forward.2} parent=5 // pred_check_branch
      %145 = sbr.rel (%p142) target = $region28
    $region27: #{conv_block_forward.2} parent=5 // pred_region
      %s146 = ssub.s32 %s10, 1
      %s147 = smul.u32 26, %s15
      %p148 = scmp.lt.s32.totalorder %s147, 51
      %s149 = scalar_select %p148, %s147, 51
      %s150 = smul.addr %s149, 4
      %s151 = scalar_lea.vmem %s0, %s150
      %p152 = pneg %p36
      %p153 = pneg %p33
      %p154 = pneg %p57
      %p155 = pneg %p54
      %p156 = pneg %p83
      %p157 = pneg %p80
      %p158 = scmp.lt.s32.totalorder %s15, 1
      %s159 = scalar_select %p158, %s15, 1
      %s160 = scalar_lea.vmem %s2, %s159
      %p161 = pneg %p109
      %p162 = pneg %p106
      %p163 = scmp.lt.s32.totalorder %s15, 1
      %s164 = scalar_select %p163, %s15, 1
      %s165 = scalar_lea.vmem %s3, %s164
      %s166 = smul.u32 26, %s15
      %p167 = scmp.lt.s32.totalorder %s166, 51
      %s168 = scalar_select %p167, %s166, 51
      %s169 = smul.addr %s168, 4
      %s170 = scalar_lea.vmem %s0, %s169
      %s171 = smul.u32 26, %s15
      %p172 = scmp.lt.s32.totalorder %s15, 1
      %s173 = scalar_select %p172, %s15, 1
      %s174 = scalar_lea.vmem %s2, %s173
      %p175 = scmp.lt.s32.totalorder %s15, 1
      %s176 = scalar_select %p175, %s15, 1
      %s177 = scalar_lea.vmem %s3, %s176
      %v179 = vld [vmem:[%s170] sm:$0xf]
      %v180 = vld [vmem:[%s170 + $0x4] sm:$0xf]
      %v181 = vld [vmem:[%s170 + $0x8] sm:$0xf]
      %v182 = vld [vmem:[%s170 + $0xc] sm:$0xf]
      %v183 = vld [vmem:[%s170 + $0x10] sm:$0xf]
      %v184 = vld [vmem:[%s170 + $0x14] sm:$0xf]
      %v185 = vld [vmem:[%s170 + $0x18] sm:$0xf]
      %v186 = vld [vmem:[%s170 + $0x1c] sm:$0xf]
      %v187 = vld [vmem:[%s170 + $0x20] sm:$0xf]
      %v188 = vld [vmem:[%s170 + $0x24] sm:$0xf]
      %v189 = vld [vmem:[%s170 + $0x28] sm:$0xf]
      %v190 = vld [vmem:[%s170 + $0x2c] sm:$0xf]
      %v191 = vld [vmem:[%s170 + $0x30] sm:$0xf]
      %v192 = vld [vmem:[%s170 + $0x34] sm:$0xf]
      %v193 = vld [vmem:[%s170 + $0x38] sm:$0xf]
      %v194 = vld [vmem:[%s170 + $0x3c] sm:$0xf]
      %v195 = vld [vmem:[%s170 + $0x40] sm:$0xf]
      %v196 = vld [vmem:[%s170 + $0x44] sm:$0xf]
      %v197 = vld [vmem:[%s170 + $0x48] sm:$0xf]
      %v198 = vld [vmem:[%s170 + $0x4c] sm:$0xf]
      %v199 = vld [vmem:[%s170 + $0x50] sm:$0xf]
      %v200 = vld [vmem:[%s170 + $0x54] sm:$0xf]
      %v201 = vld [vmem:[%s170 + $0x58] sm:$0xf]
      %v202 = vld [vmem:[%s170 + $0x5c] sm:$0xf]
      %v203 = vld [vmem:[%s170 + $0x60] sm:$0xf]
      %v204 = vld [vmem:[%s170 + $0x64] sm:$0xf]
      %v205 = vld [vmem:[%s1] sm:$0xf]
      %v206 = vld [vmem:[%s1 + $0x4] sm:$0xf]
      %v207 = vld [vmem:[%s1 + $0x8] sm:$0xf]
      %v208 = vld [vmem:[%s1 + $0xc] sm:$0xf]
      %v209 = vld [vmem:[%s1 + $0x10] sm:$0xf]
      %v210 = vld [vmem:[%s1 + $0x14] sm:$0xf]
      %v237 = vunpack.c.l.b16 %v179
      %v238 = vunpack.c.l.b16 %v180
      %v239 = vunpack.c.l.b16 %v181
      %v240 = vunpack.c.l.b16 %v182
      %v241 = vunpack.c.l.b16 %v183
      %v242 = vunpack.c.l.b16 %v184
      %v243 = vunpack.c.l.b16 %v185
      %v244 = vunpack.c.l.b16 %v186
      %v245 = vunpack.c.l.b16 %v187
      %v246 = vunpack.c.l.b16 %v188
      %v247 = vunpack.c.l.b16 %v189
      %v248 = vunpack.c.l.b16 %v190
      %v249 = vunpack.c.l.b16 %v191
      %v250 = vunpack.c.l.b16 %v192
      %v251 = vunpack.c.l.b16 %v193
      %v252 = vunpack.c.l.b16 %v194
      %v253 = vunpack.c.l.b16 %v195
      %v254 = vunpack.c.l.b16 %v196
      %v255 = vunpack.c.l.b16 %v197
      %v256 = vunpack.c.l.b16 %v198
      %v257 = vunpack.c.l.b16 %v199
      %v258 = vunpack.c.l.b16 %v200
      %v259 = vunpack.c.l.b16 %v201
      %v260 = vunpack.c.l.b16 %v202
      %v261 = vunpack.c.l.b16 %v203
      %v262 = vunpack.c.l.b16 %v204
      %v263 = vpack.c.b16 %v238, %v237
      %v264 = vpack.c.b16 %v240, %v239
      %v265 = vpack.c.b16 %v242, %v241
      %v266 = vpack.c.b16 %v244, %v243
      %v267 = vpack.c.b16 %v246, %v245
      %v268 = vpack.c.b16 %v248, %v247
      %v269 = vpack.c.b16 %v250, %v249
      %v270 = vpack.c.b16 %v252, %v251
      %v271 = vpack.c.b16 %v254, %v253
      %v272 = vpack.c.b16 %v256, %v255
      %v273 = vpack.c.b16 %v258, %v257
      %v274 = vpack.c.b16 %v260, %v259
      %v275 = vpack.c.b16 %v262, %v261
      %v282 = vunpack.c.l.b16 %v205
      %v283 = vunpack.c.l.b16 %v206
      %v284 = vunpack.c.l.b16 %v207
      %v285 = vunpack.c.l.b16 %v208
      %v286 = vunpack.c.l.b16 %v209
      %v287 = vunpack.c.l.b16 %v210
      %v288 = vpack.c.b16 %v283, %v282
      %v289 = vpack.c.b16 %v285, %v284
      %v290 = vpack.c.b16 %v287, %v286
      %vm294 = vcmask 392192
      %v296 = vsel %vm294, %v263, 0
      %v299 = vsel %vm294, %v264, 0
      %v302 = vsel %vm294, %v265, 0
      %v305 = vsel %vm294, %v266, 0
      %v308 = vsel %vm294, %v267, 0
      %v311 = vsel %vm294, %v268, 0
      %v314 = vsel %vm294, %v269, 0
      %v317 = vsel %vm294, %v270, 0
      %v320 = vsel %vm294, %v271, 0
      %v323 = vsel %vm294, %v272, 0
      %v326 = vsel %vm294, %v273, 0
      %v329 = vsel %vm294, %v274, 0
      %v332 = vsel %vm294, %v275, 0
      %334 = vmatprep.subr.bf16.mxu0 0
      %335 = vmatpush1.bf16.msra.mxu0 %v288
      %336 = vmatprep.subr.bf16.mxu0 0
      %337 = vmatpush1.bf16.msra.mxu0 %v289
      %338 = vmatprep.subr.bf16.mxu0 0
      %339 = vmatpush1.bf16.msra.mxu0 %v290
      %340 = vmatprep.subr.bf16.mxu0 0
      %341 = vmatpush1.bf16.msra.mxu0 0
      %342 = vmatprep.subr.bf16.mxu0 0
      %343 = vmatpush1.bf16.msra.mxu0 0
      %344 = vmatprep.subr.bf16.mxu0 0
      %345 = vmatpush1.bf16.msra.mxu0 0
      %346 = vmatprep.subr.bf16.mxu0 0
      %347 = vmatpush1.bf16.msra.mxu0 0
      %348 = vmatprep.subr.bf16.mxu0 0
      %349 = vmatpush1.bf16.msra.mxu0 0
      %350 = vmatprep.subr.bf16.mxu0 0
      %351 = vmatpush1.bf16.msra.mxu0 0
      %352 = vmatprep.subr.bf16.mxu0 0
      %353 = vmatpush1.bf16.msra.mxu0 0
      %354 = vmatprep.subr.bf16.mxu0 0
      %355 = vmatpush1.bf16.msra.mxu0 0
      %356 = vmatprep.subr.bf16.mxu0 0
      %357 = vmatpush1.bf16.msra.mxu0 0
      %358 = vmatprep.subr.bf16.mxu0 0
      %359 = vmatpush1.bf16.msra.mxu0 0
      %360 = vmatprep.subr.bf16.mxu0 0
      %361 = vmatpush1.bf16.msra.mxu0 0
      %362 = vmatprep.subr.bf16.mxu0 0
      %363 = vmatpush1.bf16.msra.mxu0 0
      %364 = vmatprep.subr.bf16.mxu0 0
      %365 = vmatpush1.bf16.msra.mxu0 0
      %366 = vmatprep.mubr.bf16.mxu0 0
      %367 = vmatmul.mubr.bf16.gmra.mrb[0].mxu0 %v296
      %v368 = vpop.f32.mrb[0].mxu0
      %v369 = vadd.f32 0.0, %v368
      %v370 = vpop.f32.mrb[0].mxu0
      %v371 = vpop.f32.mrb[0].mxu0
      %v372 = vadd.f32 0.0, %v371
      %v373 = vpop.f32.mrb[0].mxu0
      %374 = vmatprep.mubr.bf16.mxu0 0
      %375 = vmatmul.mubr.bf16.gmra.mrb[0].mxu0 %v299
      %v376 = vpop.f32.mrb[0].mxu0
      %v377 = vadd.f32 0.0, %v376
      %v378 = vpop.f32.mrb[0].mxu0
      %v379 = vpop.f32.mrb[0].mxu0
      %v380 = vadd.f32 0.0, %v379
      %v381 = vpop.f32.mrb[0].mxu0
      %382 = vmatprep.mubr.bf16.mxu0 0
      %383 = vmatmul.mubr.bf16.gmra.mrb[0].mxu0 %v302
      %v384 = vpop.f32.mrb[0].mxu0
      %v385 = vadd.f32 0.0, %v384
      %v386 = vpop.f32.mrb[0].mxu0
      %v387 = vpop.f32.mrb[0].mxu0
      %v388 = vadd.f32 0.0, %v387
      %v389 = vpop.f32.mrb[0].mxu0
      %390 = vmatprep.mubr.bf16.mxu0 0
      %391 = vmatmul.mubr.bf16.gmra.mrb[0].mxu0 %v305
      %v392 = vpop.f32.mrb[0].mxu0
      %v393 = vadd.f32 0.0, %v392
      %v394 = vpop.f32.mrb[0].mxu0
      %v395 = vpop.f32.mrb[0].mxu0
      %v396 = vadd.f32 0.0, %v395
      %v397 = vpop.f32.mrb[0].mxu0
      %398 = vmatprep.mubr.bf16.mxu0 0
      %399 = vmatmul.mubr.bf16.gmra.mrb[0].mxu0 %v308
      %v400 = vpop.f32.mrb[0].mxu0
      %v401 = vadd.f32 0.0, %v400
      %v402 = vpop.f32.mrb[0].mxu0
      %v403 = vpop.f32.mrb[0].mxu0
      %v404 = vadd.f32 0.0, %v403
      %v405 = vpop.f32.mrb[0].mxu0
      %406 = vmatprep.mubr.bf16.mxu0 0
      %407 = vmatmul.mubr.bf16.gmra.mrb[0].mxu0 %v311
      %v408 = vpop.f32.mrb[0].mxu0
      %v409 = vadd.f32 0.0, %v408
      %v410 = vpop.f32.mrb[0].mxu0
      %v411 = vpop.f32.mrb[0].mxu0
      %v412 = vadd.f32 0.0, %v411
      %v413 = vpop.f32.mrb[0].mxu0
      %414 = vmatprep.mubr.bf16.mxu0 0
      %415 = vmatmul.mubr.bf16.gmra.mrb[0].mxu0 %v314
      %v416 = vpop.f32.mrb[0].mxu0
      %v417 = vadd.f32 0.0, %v416
      %v418 = vpop.f32.mrb[0].mxu0
      %v419 = vpop.f32.mrb[0].mxu0
      %v420 = vadd.f32 0.0, %v419
      %v421 = vpop.f32.mrb[0].mxu0
      %422 = vmatprep.mubr.bf16.mxu0 0
      %423 = vmatmul.mubr.bf16.gmra.mrb[0].mxu0 %v317
      %v424 = vpop.f32.mrb[0].mxu0
      %v425 = vadd.f32 0.0, %v424
      %v426 = vpop.f32.mrb[0].mxu0
      %v427 = vpop.f32.mrb[0].mxu0
      %v428 = vadd.f32 0.0, %v427
      %v429 = vpop.f32.mrb[0].mxu0
      %430 = vmatprep.mubr.bf16.mxu0 0
      %431 = vmatmul.mubr.bf16.gmra.mrb[0].mxu0 %v320
      %v432 = vpop.f32.mrb[0].mxu0
      %v433 = vadd.f32 0.0, %v432
      %v434 = vpop.f32.mrb[0].mxu0
      %v435 = vpop.f32.mrb[0].mxu0
      %v436 = vadd.f32 0.0, %v435
      %v437 = vpop.f32.mrb[0].mxu0
      %438 = vmatprep.mubr.bf16.mxu0 0
      %439 = vmatmul.mubr.bf16.gmra.mrb[0].mxu0 %v323
      %v440 = vpop.f32.mrb[0].mxu0
      %v441 = vadd.f32 0.0, %v440
      %v442 = vpop.f32.mrb[0].mxu0
      %v443 = vpop.f32.mrb[0].mxu0
      %v444 = vadd.f32 0.0, %v443
      %v445 = vpop.f32.mrb[0].mxu0
      %446 = vmatprep.mubr.bf16.mxu0 0
      %447 = vmatmul.mubr.bf16.gmra.mrb[0].mxu0 %v326
      %v448 = vpop.f32.mrb[0].mxu0
      %v449 = vadd.f32 0.0, %v448
      %v450 = vpop.f32.mrb[0].mxu0
      %v451 = vpop.f32.mrb[0].mxu0
      %v452 = vadd.f32 0.0, %v451
      %v453 = vpop.f32.mrb[0].mxu0
      %454 = vmatprep.mubr.bf16.mxu0 0
      %455 = vmatmul.mubr.bf16.gmra.mrb[0].mxu0 %v329
      %v456 = vpop.f32.mrb[0].mxu0
      %v457 = vadd.f32 0.0, %v456
      %v458 = vpop.f32.mrb[0].mxu0
      %v459 = vpop.f32.mrb[0].mxu0
      %v460 = vadd.f32 0.0, %v459
      %v461 = vpop.f32.mrb[0].mxu0
      %462 = vmatprep.mubr.bf16.mxu0 0
      %463 = vmatmul.mubr.bf16.gmra.mrb[0].mxu0 %v332
      %v464 = vpop.f32.mrb[0].mxu0
      %v465 = vadd.f32 0.0, %v464
      %v466 = vpop.f32.mrb[0].mxu0
      %v467 = vpop.f32.mrb[0].mxu0
      %v468 = vadd.f32 0.0, %v467
      %v469 = vpop.f32.mrb[0].mxu0
      %470 = vdwg.mxu0
      %v471 = vadd.f32 %v369, %v372
      %v472 = vadd.f32 %v471, %v377
      %v473 = vadd.f32 %v472, %v380
      %v474 = vadd.f32 %v473, %v385
      %v475 = vadd.f32 %v474, %v388
      %v476 = vadd.f32 %v475, %v393
      %v477 = vadd.f32 %v476, %v396
      %v478 = vadd.f32 %v477, %v401
      %v479 = vadd.f32 %v478, %v404
      %v480 = vadd.f32 %v479, %v409
      %v481 = vadd.f32 %v480, %v412
      %v482 = vadd.f32 %v481, %v417
      %v483 = vadd.f32 %v482, %v420
      %v484 = vadd.f32 %v483, %v425
      %v485 = vadd.f32 %v484, %v428
      %v486 = vadd.f32 %v485, %v433
      %v487 = vadd.f32 %v486, %v436
      %v488 = vadd.f32 %v487, %v441
      %v489 = vadd.f32 %v488, %v444
      %v490 = vadd.f32 %v489, %v449
      %v491 = vadd.f32 %v490, %v452
      %v492 = vadd.f32 %v491, %v457
      %v493 = vadd.f32 %v492, %v460
      %v494 = vadd.f32 %v493, %v465
      %v495 = vadd.f32 %v494, %v468
      %v496 = vrot.slane %v495, 4
      %v497 = vadd.f32 %v495, %v496
      %v498 = vrot.slane %v497, 2
      %v499 = vadd.f32 %v497, %v498
      %v500 = vrot.slane %v499, 1
      %v501 = vadd.f32 %v499, %v500
      %502 = vst [vmem:[%s174] sm:$0x1] %v501
      %v503 = vmul.f32 %v369, %v369
      %v504 = vmul.f32 %v372, %v372
      %v505 = vmul.f32 %v377, %v377
      %v506 = vmul.f32 %v380, %v380
      %v507 = vmul.f32 %v385, %v385
      %v508 = vmul.f32 %v388, %v388
      %v509 = vmul.f32 %v393, %v393
      %v510 = vmul.f32 %v396, %v396
      %v511 = vmul.f32 %v401, %v401
      %v512 = vmul.f32 %v404, %v404
      %v513 = vmul.f32 %v409, %v409
      %v514 = vmul.f32 %v412, %v412
      %v515 = vmul.f32 %v417, %v417
      %v516 = vmul.f32 %v420, %v420
      %v517 = vmul.f32 %v425, %v425
      %v518 = vmul.f32 %v428, %v428
      %v519 = vmul.f32 %v433, %v433
      %v520 = vmul.f32 %v436, %v436
      %v521 = vmul.f32 %v441, %v441
      %v522 = vmul.f32 %v444, %v444
      %v523 = vmul.f32 %v449, %v449
      %v524 = vmul.f32 %v452, %v452
      %v525 = vmul.f32 %v457, %v457
      %v526 = vmul.f32 %v460, %v460
      %v527 = vmul.f32 %v465, %v465
      %v528 = vmul.f32 %v468, %v468
      %v529 = vadd.f32 %v503, %v504
      %v530 = vadd.f32 %v529, %v505
      %v531 = vadd.f32 %v530, %v506
      %v532 = vadd.f32 %v531, %v507
      %v533 = vadd.f32 %v532, %v508
      %v534 = vadd.f32 %v533, %v509
      %v535 = vadd.f32 %v534, %v510
      %v536 = vadd.f32 %v535, %v511
      %v537 = vadd.f32 %v536, %v512
      %v538 = vadd.f32 %v537, %v513
      %v539 = vadd.f32 %v538, %v514
      %v540 = vadd.f32 %v539, %v515
      %v541 = vadd.f32 %v540, %v516
      %v542 = vadd.f32 %v541, %v517
      %v543 = vadd.f32 %v542, %v518
      %v544 = vadd.f32 %v543, %v519
      %v545 = vadd.f32 %v544, %v520
      %v546 = vadd.f32 %v545, %v521
      %v547 = vadd.f32 %v546, %v522
      %v548 = vadd.f32 %v547, %v523
      %v549 = vadd.f32 %v548, %v524
      %v550 = vadd.f32 %v549, %v525
      %v551 = vadd.f32 %v550, %v526
      %v552 = vadd.f32 %v551, %v527
      %v553 = vadd.f32 %v552, %v528
      %v554 = vrot.slane %v553, 4
      %v555 = vadd.f32 %v553, %v554
      %v556 = vrot.slane %v555, 2
      %v557 = vadd.f32 %v555, %v556
      %v558 = vrot.slane %v557, 1
      %v559 = vadd.f32 %v557, %v558
      %560 = vst [vmem:[%s177] sm:$0x1] %v559
      %p561 = scmp.lt.s32.totalorder %s15, 1
      %s562 = scalar_select %p561, %s15, 1
      %s563 = scalar_lea.vmem %s2, %s562
      %p564 = scmp.lt.s32.totalorder %s15, 1
      %s565 = scalar_select %p564, %s15, 1
      %s566 = scalar_lea.vmem %s3, %s565
      // Predicated region
      $region29: #{conv_block_forward.2} parent=27 // pred_check
        %p567 = pneg %p80
      $region30: #{conv_block_forward.2} parent=27 // pred_check_branch
        %569 = sbr.rel (%p567) target = $region32
      $region31: #{conv_block_forward.2} parent=27 // pred_region
        _
      $region32: #{conv_block_forward.2} parent=27 // pred_fallthru
        _
      // Predicated region
      $region33: #{conv_block_forward.2} parent=27 // pred_check
        %p570 = pneg %p106
      $region34: #{conv_block_forward.2} parent=27 // pred_check_branch
        %572 = sbr.rel (%p570) target = $region36
      $region35: #{conv_block_forward.2} parent=27 // pred_region
        _
      $region36: #{conv_block_forward.2} parent=27 // pred_fallthru
        _
    $region28: #{conv_block_forward.2} parent=5 // pred_fallthru
      _
    %p573 = scmp.le.s32.totalorder 2, %s10
    // Predicated region
    $region37: #{conv_block_forward.2} parent=5 // pred_check
      %p574 = pneg %p573
    $region38: #{conv_block_forward.2} parent=5 // pred_check_branch
      %576 = sbr.rel (%p574) target = $region40
    $region39: #{conv_block_forward.2} parent=5 // pred_region
      %s577 = ssub.s32 %s10, 2
      // Predicated region
      $region41: #{conv_block_forward.2} parent=39 // pred_check
        %p578 = pneg %p86
      $region42: #{conv_block_forward.2} parent=39 // pred_check_branch
        %580 = sbr.rel (%p578) target = $region44
      $region43: #{conv_block_forward.2} parent=39 // pred_region
        %p581 = scmp.lt.s32.totalorder %s16, 1
        %s582 = scalar_select %p581, %s16, 1
        %s583 = scalar_lea.vmem %s2, %s582
      $region44: #{conv_block_forward.2} parent=39 // pred_fallthru
        _
      // Predicated region
      $region45: #{conv_block_forward.2} parent=39 // pred_check
        %p584 = pneg %p112
      $region46: #{conv_block_forward.2} parent=39 // pred_check_branch
        %586 = sbr.rel (%p584) target = $region48
      $region47: #{conv_block_forward.2} parent=39 // pred_region
        %p587 = scmp.lt.s32.totalorder %s16, 1
        %s588 = scalar_select %p587, %s16, 1
        %s589 = scalar_lea.vmem %s3, %s588
      $region48: #{conv_block_forward.2} parent=39 // pred_fallthru
        _
    $region40: #{conv_block_forward.2} parent=5 // pred_fallthru
      _
  $region6: #{conv_block_forward.2} parent=0 // loop_footer
    %s14 = sadd.s32 1, %s10
  $region7: #{conv_block_forward.2} parent=0 // loop_footer_branch
    %9 = sbr.rel target = $region3
  $region8: #{conv_block_forward.2} parent=0 // loop_exit
    _

// kernel: conv_block_forward.3
$region0: #{conv_block_forward.3}
  #allocation0 [shape = 'u32[]', space=smem, size = 0x4, offset = 0x4, fixed_abs, tag = 'smem constant byte address 0x4 - core index']
  #allocation1 [shape = 'u32[144,128]{1,0:T(1,128)}', space=vmem, size = 0x12000, scoped, tag = 'internal scratch']
  %s0 = inlined_call_operand.vmem [shape: bf16[416,48], index: 0, kind: input, shape index: {}]
  %s1 = inlined_call_operand.vmem [shape: bf16[48,128], index: 1, kind: input, shape index: {}]
  %s2 = inlined_call_operand.vmem [shape: f32[1,128], index: 2, kind: input, shape index: {}]
  %s3 = inlined_call_operand.vmem [shape: f32[1,128], index: 3, kind: input, shape index: {}]
  %s4 = inlined_call_operand.vmem [shape: bf16[416,128], index: 4, kind: output, shape index: {}]
  %s5 = sld [smem:[#allocation0]]
  $region49: #{conv_block_forward.3} parent=0
    _
  %s7 = ssub.s32 1, %s5
  %s8 = scalar_select 0, %s7, %s5
  loop: start=0, step=1, limit=4
  $region2: #{conv_block_forward.3} parent=0 // loop_pre_header
    _
  $region3: #{conv_block_forward.3} parent=0 // loop_header
    %s10 = sphi 0, %s14
    %p11 = scmp.ge.s32.totalorder %s10, 4
    %s20 = sphi 0, %s22
    %s23 = sphi 0, %s20
    %s24 = sphi 0, %s23
    %s40 = sphi 0, %s24
    %s44 = sphi 0, %s44
    %s46 = sphi 0, %s44
    %s47 = sphi 0, %s46
    %s61 = sphi 0, %s47
    %s65 = sphi 0, %s65
    %s67 = sphi 0, %s65
    %s68 = sphi 0, %s67
    %s82 = sphi 0, %s68
    %s86 = sphi 0, %s86
    %s88 = sphi 0, %s86
    %s89 = sphi 0, %s88
    %s103 = sphi 0, %s89
    %s109 = sphi 0, %s111
    %s112 = sphi 0, %s109
    %s113 = sphi 0, %s112
    %s129 = sphi 0, %s113
  $region4: #{conv_block_forward.3} parent=0 // loop_header_branch
    %13 = sbr.rel (%p11) target = $region8
  $region5: #{conv_block_forward.3} parent=0 // loop_body
    %s15 = ssub.s32 %s10, 1
    %s16 = ssub.s32 %s10, 2
    %s17 = sadd.s32 %s10, 1
    %s18 = ssub.s32 %s10, %s17
    %p19 = scmp.eq.s32.totalorder %s18, 0
    %s21 = sadd.s32 %s20, 1
    %s22 = scalar_select %p19, %s20, %s21
    %p25 = pneg %p19
    %p26 = scmp.eq.s32.totalorder %s10, 1
    %p27 = por %p25, %p26
    %p28 = scmp.ne.s32.totalorder %s20, %s23
    %p29 = scmp.eq.s32.totalorder %s10, 0
    %p30 = por %p28, %p29
    %p31 = scmp.ne.s32.totalorder %s20, %s23
    %p32 = scmp.eq.s32.totalorder %s15, 1
    %p33 = por %p31, %p32
    %p34 = scmp.ne.s32.totalorder %s23, %s24
    %p35 = scmp.eq.s32.totalorder %s15, 0
    %p36 = por %p34, %p35
    %p37 = scmp.ne.s32.totalorder %s23, %s24
    %p38 = scmp.eq.s32.totalorder %s16, 1
    %p39 = por %p37, %p38
    %p41 = scmp.ne.s32.totalorder %s24, %s40
    %p42 = scmp.eq.s32.totalorder %s16, 0
    %p43 = por %p41, %p42
    %s45 = sadd.s32 %s44, 1
    %p48 = scmp.eq.s32.totalorder %s10, 1
    %p49 = scmp.ne.s32.totalorder %s44, %s46
    %p50 = scmp.eq.s32.totalorder %s10, 0
    %p51 = por %p49, %p50
    %p52 = scmp.ne.s32.totalorder %s44, %s46
    %p53 = scmp.eq.s32.totalorder %s15, 1
    %p54 = por %p52, %p53
    %p55 = scmp.ne.s32.totalorder %s46, %s47
    %p56 = scmp.eq.s32.totalorder %s15, 0
    %p57 = por %p55, %p56
    %p58 = scmp.ne.s32.totalorder %s46, %s47
    %p59 = scmp.eq.s32.totalorder %s16, 1
    %p60 = por %p58, %p59
    %p62 = scmp.ne.s32.totalorder %s47, %s61
    %p63 = scmp.eq.s32.totalorder %s16, 0
    %p64 = por %p62, %p63
    %s66 = sadd.s32 %s65, 1
    %p69 = scmp.eq.s32.totalorder %s10, 1
    %p70 = scmp.ne.s32.totalorder %s65, %s67
    %p71 = scmp.eq.s32.totalorder %s10, 0
    %p72 = por %p70, %p71
    %p73 = scmp.ne.s32.totalorder %s65, %s67
    %p74 = scmp.eq.s32.totalorder %s15, 1
    %p75 = por %p73, %p74
    %p76 = scmp.ne.s32.totalorder %s67, %s68
    %p77 = scmp.eq.s32.totalorder %s15, 0
    %p78 = por %p76, %p77
    %p79 = scmp.ne.s32.totalorder %s67, %s68
    %p80 = scmp.eq.s32.totalorder %s16, 1
    %p81 = por %p79, %p80
    %p83 = scmp.ne.s32.totalorder %s68, %s82
    %p84 = scmp.eq.s32.totalorder %s16, 0
    %p85 = por %p83, %p84
    %s87 = sadd.s32 %s86, 1
    %p90 = scmp.eq.s32.totalorder %s10, 1
    %p91 = scmp.ne.s32.totalorder %s86, %s88
    %p92 = scmp.eq.s32.totalorder %s10, 0
    %p93 = por %p91, %p92
    %p94 = scmp.ne.s32.totalorder %s86, %s88
    %p95 = scmp.eq.s32.totalorder %s15, 1
    %p96 = por %p94, %p95
    %p97 = scmp.ne.s32.totalorder %s88, %s89
    %p98 = scmp.eq.s32.totalorder %s15, 0
    %p99 = por %p97, %p98
    %p100 = scmp.ne.s32.totalorder %s88, %s89
    %p101 = scmp.eq.s32.totalorder %s16, 1
    %p102 = por %p100, %p101
    %p104 = scmp.ne.s32.totalorder %s89, %s103
    %p105 = scmp.eq.s32.totalorder %s16, 0
    %p106 = por %p104, %p105
    %s107 = ssub.s32 %s10, %s17
    %p108 = scmp.eq.s32.totalorder %s107, 0
    %s110 = sadd.s32 %s109, 1
    %s111 = scalar_select %p108, %s109, %s110
    %p114 = pneg %p108
    %p115 = scmp.eq.s32.totalorder %s10, 1
    %p116 = por %p114, %p115
    %p117 = scmp.ne.s32.totalorder %s109, %s112
    %p118 = scmp.eq.s32.totalorder %s10, 0
    %p119 = por %p117, %p118
    %p120 = scmp.ne.s32.totalorder %s109, %s112
    %p121 = scmp.eq.s32.totalorder %s15, 1
    %p122 = por %p120, %p121
    %p123 = scmp.ne.s32.totalorder %s112, %s113
    %p124 = scmp.eq.s32.totalorder %s15, 0
    %p125 = por %p123, %p124
    %p126 = scmp.ne.s32.totalorder %s112, %s113
    %p127 = scmp.eq.s32.totalorder %s16, 1
    %p128 = por %p126, %p127
    %p130 = scmp.ne.s32.totalorder %s113, %s129
    %p131 = scmp.eq.s32.totalorder %s16, 0
    %p132 = por %p130, %p131
    %p133 = scmp.le.s32.totalorder 1, %s10
    %p134 = scmp.lt.s32.totalorder %s10, 3
    %p135 = pnand %p133, %p134
    %p136 = pneg %p135
    // Predicated region
    $region9: #{conv_block_forward.3} parent=5 // pred_check
      _
    $region10: #{conv_block_forward.3} parent=5 // pred_check_branch
      %138 = sbr.rel (%p135) target = $region12
    $region11: #{conv_block_forward.3} parent=5 // pred_region
      %s139 = ssub.s32 %s10, 1
      // Predicated region
      $region13: #{conv_block_forward.3} parent=11 // pred_check
        %p140 = pneg %p57
      $region14: #{conv_block_forward.3} parent=11 // pred_check_branch
        %142 = sbr.rel (%p140) target = $region16
      $region15: #{conv_block_forward.3} parent=11 // pred_region
        _
      $region16: #{conv_block_forward.3} parent=11 // pred_fallthru
        _
      // Predicated region
      $region17: #{conv_block_forward.3} parent=11 // pred_check
        %p143 = pneg %p78
      $region18: #{conv_block_forward.3} parent=11 // pred_check_branch
        %145 = sbr.rel (%p143) target = $region20
      $region19: #{conv_block_forward.3} parent=11 // pred_region
        _
      $region20: #{conv_block_forward.3} parent=11 // pred_fallthru
        _
      // Predicated region
      $region21: #{conv_block_forward.3} parent=11 // pred_check
        %p146 = pneg %p99
      $region22: #{conv_block_forward.3} parent=11 // pred_check_branch
        %148 = sbr.rel (%p146) target = $region24
      $region23: #{conv_block_forward.3} parent=11 // pred_region
        _
      $region24: #{conv_block_forward.3} parent=11 // pred_fallthru
        _
    $region12: #{conv_block_forward.3} parent=5 // pred_fallthru
      _
    %p149 = scmp.lt.s32.totalorder %s10, 2
    // Predicated region
    $region25: #{conv_block_forward.3} parent=5 // pred_check
      %p150 = pneg %p149
    $region26: #{conv_block_forward.3} parent=5 // pred_check_branch
      %152 = sbr.rel (%p150) target = $region28
    $region27: #{conv_block_forward.3} parent=5 // pred_region
      // Predicated region
      $region29: #{conv_block_forward.3} parent=27 // pred_check
        %p153 = pneg %p30
      $region30: #{conv_block_forward.3} parent=27 // pred_check_branch
        %155 = sbr.rel (%p153) target = $region32
      $region31: #{conv_block_forward.3} parent=27 // pred_region
        %s156 = smul.u32 26, %s10
        %p157 = scmp.lt.s32.totalorder %s156, 51
        %s158 = scalar_select %p157, %s156, 51
        %s159 = smul.addr %s158, 4
        %s160 = scalar_lea.vmem %s0, %s159
        %s161 = smul.u32 26, %s10
      $region32: #{conv_block_forward.3} parent=27 // pred_fallthru
        _
    $region28: #{conv_block_forward.3} parent=5 // pred_fallthru
      _
    %p162 = scmp.le.s32.totalorder 1, %s10
    %p163 = scmp.lt.s32.totalorder %s10, 3
    %p164 = pnand %p162, %p163
    %p165 = pneg %p164
    // Predicated region
    $region33: #{conv_block_forward.3} parent=5 // pred_check
      _
    $region34: #{conv_block_forward.3} parent=5 // pred_check_branch
      %167 = sbr.rel (%p164) target = $region36
    $region35: #{conv_block_forward.3} parent=5 // pred_region
      %s168 = ssub.s32 %s10, 1
      %s169 = smul.u32 26, %s15
      %p170 = scmp.lt.s32.totalorder %s169, 51
      %s171 = scalar_select %p170, %s169, 51
      %s172 = smul.addr %s171, 4
      %s173 = scalar_lea.vmem %s0, %s172
      %p174 = pneg %p36
      %p175 = pneg %p33
      %p176 = pneg %p57
      %p177 = pneg %p54
      %p178 = pneg %p78
      %p179 = pneg %p75
      %p180 = pneg %p99
      %p181 = pneg %p96
      %p182 = pneg %p125
      %p183 = pneg %p122
      %s184 = smul.u32 26, %s15
      %p185 = scmp.lt.s32.totalorder %s184, 51
      %s186 = scalar_select %p185, %s184, 51
      %s187 = smul.addr %s186, 4
      %s188 = scalar_lea.vmem %s4, %s187
      %s189 = smul.u32 26, %s15
      %p190 = scmp.lt.s32.totalorder %s189, 51
      %s191 = scalar_select %p190, %s189, 51
      %s192 = smul.addr %s191, 4
      %s193 = scalar_lea.vmem %s0, %s192
      %s194 = smul.u32 26, %s15
      %s195 = smul.u32 26, %s15
      %p196 = scmp.lt.s32.totalorder %s195, 51
      %s197 = scalar_select %p196, %s195, 51
      %s198 = smul.addr %s197, 4
      %s199 = scalar_lea.vmem %s4, %s198
      %s200 = smul.u32 26, %s15
      %v202 = vld [vmem:[%s193] sm:$0xf]
      %v203 = vld [vmem:[%s193 + $0x4] sm:$0xf]
      %v204 = vld [vmem:[%s193 + $0x8] sm:$0xf]
      %v205 = vld [vmem:[%s193 + $0xc] sm:$0xf]
      %v206 = vld [vmem:[%s193 + $0x10] sm:$0xf]
      %v207 = vld [vmem:[%s193 + $0x14] sm:$0xf]
      %v208 = vld [vmem:[%s193 + $0x18] sm:$0xf]
      %v209 = vld [vmem:[%s193 + $0x1c] sm:$0xf]
      %v210 = vld [vmem:[%s193 + $0x20] sm:$0xf]
      %v211 = vld [vmem:[%s193 + $0x24] sm:$0xf]
      %v212 = vld [vmem:[%s193 + $0x28] sm:$0xf]
      %v213 = vld [vmem:[%s193 + $0x2c] sm:$0xf]
      %v214 = vld [vmem:[%s193 + $0x30] sm:$0xf]
      %v215 = vld [vmem:[%s193 + $0x34] sm:$0xf]
      %v216 = vld [vmem:[%s193 + $0x38] sm:$0xf]
      %v217 = vld [vmem:[%s193 + $0x3c] sm:$0xf]
      %v218 = vld [vmem:[%s193 + $0x40] sm:$0xf]
      %v219 = vld [vmem:[%s193 + $0x44] sm:$0xf]
      %v220 = vld [vmem:[%s193 + $0x48] sm:$0xf]
      %v221 = vld [vmem:[%s193 + $0x4c] sm:$0xf]
      %v222 = vld [vmem:[%s193 + $0x50] sm:$0xf]
      %v223 = vld [vmem:[%s193 + $0x54] sm:$0xf]
      %v224 = vld [vmem:[%s193 + $0x58] sm:$0xf]
      %v225 = vld [vmem:[%s193 + $0x5c] sm:$0xf]
      %v226 = vld [vmem:[%s193 + $0x60] sm:$0xf]
      %v227 = vld [vmem:[%s193 + $0x64] sm:$0xf]
      %v228 = vld [vmem:[%s1] sm:$0xf]
      %v229 = vld [vmem:[%s1 + $0x4] sm:$0xf]
      %v230 = vld [vmem:[%s1 + $0x8] sm:$0xf]
      %v231 = vld [vmem:[%s1 + $0xc] sm:$0xf]
      %v232 = vld [vmem:[%s1 + $0x10] sm:$0xf]
      %v233 = vld [vmem:[%s1 + $0x14] sm:$0xf]
      %v260 = vunpack.c.l.b16 %v202
      %v261 = vunpack.c.l.b16 %v203
      %v262 = vunpack.c.l.b16 %v204
      %v263 = vunpack.c.l.b16 %v205
      %v264 = vunpack.c.l.b16 %v206
      %v265 = vunpack.c.l.b16 %v207
      %v266 = vunpack.c.l.b16 %v208
      %v267 = vunpack.c.l.b16 %v209
      %v268 = vunpack.c.l.b16 %v210
      %v269 = vunpack.c.l.b16 %v211
      %v270 = vunpack.c.l.b16 %v212
      %v271 = vunpack.c.l.b16 %v213
      %v272 = vunpack.c.l.b16 %v214
      %v273 = vunpack.c.l.b16 %v215
      %v274 = vunpack.c.l.b16 %v216
      %v275 = vunpack.c.l.b16 %v217
      %v276 = vunpack.c.l.b16 %v218
      %v277 = vunpack.c.l.b16 %v219
      %v278 = vunpack.c.l.b16 %v220
      %v279 = vunpack.c.l.b16 %v221
      %v280 = vunpack.c.l.b16 %v222
      %v281 = vunpack.c.l.b16 %v223
      %v282 = vunpack.c.l.b16 %v224
      %v283 = vunpack.c.l.b16 %v225
      %v284 = vunpack.c.l.b16 %v226
      %v285 = vunpack.c.l.b16 %v227
      %v286 = vpack.c.b16 %v261, %v260
      %v287 = vpack.c.b16 %v263, %v262
      %v288 = vpack.c.b16 %v265, %v264
      %v289 = vpack.c.b16 %v267, %v266
      %v290 = vpack.c.b16 %v269, %v268
      %v291 = vpack.c.b16 %v271, %v270
      %v292 = vpack.c.b16 %v273, %v272
      %v293 = vpack.c.b16 %v275, %v274
      %v294 = vpack.c.b16 %v277, %v276
      %v295 = vpack.c.b16 %v279, %v278
      %v296 = vpack.c.b16 %v281, %v280
      %v297 = vpack.c.b16 %v283, %v282
      %v298 = vpack.c.b16 %v285, %v284
      %v305 = vunpack.c.l.b16 %v228
      %v306 = vunpack.c.l.b16 %v229
      %v307 = vunpack.c.l.b16 %v230
      %v308 = vunpack.c.l.b16 %v231
      %v309 = vunpack.c.l.b16 %v232
      %v310 = vunpack.c.l.b16 %v233
      %v311 = vpack.c.b16 %v306, %v305
      %v312 = vpack.c.b16 %v308, %v307
      %v313 = vpack.c.b16 %v310, %v309
      %vm317 = vcmask 392192
      %v319 = vsel %vm317, %v286, 0
      %v322 = vsel %vm317, %v287, 0
      %v325 = vsel %vm317, %v288, 0
      %v328 = vsel %vm317, %v289, 0
      %v331 = vsel %vm317, %v290, 0
      %v334 = vsel %vm317, %v291, 0
      %v337 = vsel %vm317, %v292, 0
      %v340 = vsel %vm317, %v293, 0
      %v343 = vsel %vm317, %v294, 0
      %v346 = vsel %vm317, %v295, 0
      %v349 = vsel %vm317, %v296, 0
      %v352 = vsel %vm317, %v297, 0
      %v355 = vsel %vm317, %v298, 0
      %357 = vmatprep.subr.bf16.mxu0 0
      %358 = vmatpush1.bf16.msra.mxu0 %v311
      %359 = vmatprep.subr.bf16.mxu0 0
      %360 = vmatpush1.bf16.msra.mxu0 %v312
      %361 = vmatprep.subr.bf16.mxu0 0
      %362 = vmatpush1.bf16.msra.mxu0 %v313
      %363 = vmatprep.subr.bf16.mxu0 0
      %364 = vmatpush1.bf16.msra.mxu0 0
      %365 = vmatprep.subr.bf16.mxu0 0
      %366 = vmatpush1.bf16.msra.mxu0 0
      %367 = vmatprep.subr.bf16.mxu0 0
      %368 = vmatpush1.bf16.msra.mxu0 0
      %369 = vmatprep.subr.bf16.mxu0 0
      %370 = vmatpush1.bf16.msra.mxu0 0
      %371 = vmatprep.subr.bf16.mxu0 0
      %372 = vmatpush1.bf16.msra.mxu0 0
      %373 = vmatprep.subr.bf16.mxu0 0
      %374 = vmatpush1.bf16.msra.mxu0 0
      %375 = vmatprep.subr.bf16.mxu0 0
      %376 = vmatpush1.bf16.msra.mxu0 0
      %377 = vmatprep.subr.bf16.mxu0 0
      %378 = vmatpush1.bf16.msra.mxu0 0
      %379 = vmatprep.subr.bf16.mxu0 0
      %380 = vmatpush1.bf16.msra.mxu0 0
      %381 = vmatprep.subr.bf16.mxu0 0
      %382 = vmatpush1.bf16.msra.mxu0 0
      %383 = vmatprep.subr.bf16.mxu0 0
      %384 = vmatpush1.bf16.msra.mxu0 0
      %385 = vmatprep.subr.bf16.mxu0 0
      %386 = vmatpush1.bf16.msra.mxu0 0
      %387 = vmatprep.subr.bf16.mxu0 0
      %388 = vmatpush1.bf16.msra.mxu0 0
      %389 = vmatprep.mubr.bf16.mxu0 0
      %390 = vmatmul.mubr.bf16.gmra.mrb[0].mxu0 %v319
      %v391 = vpop.f32.mrb[0].mxu0
      %v392 = vadd.f32 0.0, %v391
      %v393 = vpop.f32.mrb[0].mxu0
      %v394 = vpop.f32.mrb[0].mxu0
      %v395 = vadd.f32 0.0, %v394
      %v396 = vpop.f32.mrb[0].mxu0
      %397 = vmatprep.mubr.bf16.mxu0 0
      %398 = vmatmul.mubr.bf16.gmra.mrb[0].mxu0 %v322
      %v399 = vpop.f32.mrb[0].mxu0
      %v400 = vadd.f32 0.0, %v399
      %v401 = vpop.f32.mrb[0].mxu0
      %v402 = vpop.f32.mrb[0].mxu0
      %v403 = vadd.f32 0.0, %v402
      %v404 = vpop.f32.mrb[0].mxu0
      %405 = vmatprep.mubr.bf16.mxu0 0
      %406 = vmatmul.mubr.bf16.gmra.mrb[0].mxu0 %v325
      %v407 = vpop.f32.mrb[0].mxu0
      %v408 = vadd.f32 0.0, %v407
      %v409 = vpop.f32.mrb[0].mxu0
      %v410 = vpop.f32.mrb[0].mxu0
      %v411 = vadd.f32 0.0, %v410
      %v412 = vpop.f32.mrb[0].mxu0
      %413 = vmatprep.mubr.bf16.mxu0 0
      %414 = vmatmul.mubr.bf16.gmra.mrb[0].mxu0 %v328
      %v415 = vpop.f32.mrb[0].mxu0
      %v416 = vadd.f32 0.0, %v415
      %v417 = vpop.f32.mrb[0].mxu0
      %v418 = vpop.f32.mrb[0].mxu0
      %v419 = vadd.f32 0.0, %v418
      %v420 = vpop.f32.mrb[0].mxu0
      %421 = vmatprep.mubr.bf16.mxu0 0
      %422 = vmatmul.mubr.bf16.gmra.mrb[0].mxu0 %v331
      %v423 = vpop.f32.mrb[0].mxu0
      %v424 = vadd.f32 0.0, %v423
      %v425 = vpop.f32.mrb[0].mxu0
      %v426 = vpop.f32.mrb[0].mxu0
      %v427 = vadd.f32 0.0, %v426
      %v428 = vpop.f32.mrb[0].mxu0
      %429 = vmatprep.mubr.bf16.mxu0 0
      %430 = vmatmul.mubr.bf16.gmra.mrb[0].mxu0 %v334
      %v431 = vpop.f32.mrb[0].mxu0
      %v432 = vadd.f32 0.0, %v431
      %v433 = vpop.f32.mrb[0].mxu0
      %v434 = vpop.f32.mrb[0].mxu0
      %v435 = vadd.f32 0.0, %v434
      %v436 = vpop.f32.mrb[0].mxu0
      %437 = vmatprep.mubr.bf16.mxu0 0
      %438 = vmatmul.mubr.bf16.gmra.mrb[0].mxu0 %v337
      %v439 = vpop.f32.mrb[0].mxu0
      %v440 = vadd.f32 0.0, %v439
      %v441 = vpop.f32.mrb[0].mxu0
      %v442 = vpop.f32.mrb[0].mxu0
      %v443 = vadd.f32 0.0, %v442
      %v444 = vpop.f32.mrb[0].mxu0
      %445 = vmatprep.mubr.bf16.mxu0 0
      %446 = vmatmul.mubr.bf16.gmra.mrb[0].mxu0 %v340
      %v447 = vpop.f32.mrb[0].mxu0
      %v448 = vadd.f32 0.0, %v447
      %v449 = vpop.f32.mrb[0].mxu0
      %v450 = vpop.f32.mrb[0].mxu0
      %v451 = vadd.f32 0.0, %v450
      %v452 = vpop.f32.mrb[0].mxu0
      %453 = vmatprep.mubr.bf16.mxu0 0
      %454 = vmatmul.mubr.bf16.gmra.mrb[0].mxu0 %v343
      %v455 = vpop.f32.mrb[0].mxu0
      %v456 = vadd.f32 0.0, %v455
      %v457 = vpop.f32.mrb[0].mxu0
      %v458 = vpop.f32.mrb[0].mxu0
      %v459 = vadd.f32 0.0, %v458
      %v460 = vpop.f32.mrb[0].mxu0
      %461 = vmatprep.mubr.bf16.mxu0 0
      %462 = vmatmul.mubr.bf16.gmra.mrb[0].mxu0 %v346
      %v463 = vpop.f32.mrb[0].mxu0
      %v464 = vadd.f32 0.0, %v463
      %v465 = vpop.f32.mrb[0].mxu0
      %v466 = vpop.f32.mrb[0].mxu0
      %v467 = vadd.f32 0.0, %v466
      %v468 = vpop.f32.mrb[0].mxu0
      %469 = vmatprep.mubr.bf16.mxu0 0
      %470 = vmatmul.mubr.bf16.gmra.mrb[0].mxu0 %v349
      %v471 = vpop.f32.mrb[0].mxu0
      %v472 = vadd.f32 0.0, %v471
      %v473 = vpop.f32.mrb[0].mxu0
      %v474 = vpop.f32.mrb[0].mxu0
      %v475 = vadd.f32 0.0, %v474
      %v476 = vpop.f32.mrb[0].mxu0
      %477 = vmatprep.mubr.bf16.mxu0 0
      %478 = vmatmul.mubr.bf16.gmra.mrb[0].mxu0 %v352
      %v479 = vpop.f32.mrb[0].mxu0
      %v480 = vadd.f32 0.0, %v479
      %v481 = vpop.f32.mrb[0].mxu0
      %v482 = vpop.f32.mrb[0].mxu0
      %v483 = vadd.f32 0.0, %v482
      %v484 = vpop.f32.mrb[0].mxu0
      %485 = vmatprep.mubr.bf16.mxu0 0
      %486 = vmatmul.mubr.bf16.gmra.mrb[0].mxu0 %v355
      %v487 = vpop.f32.mrb[0].mxu0
      %v488 = vadd.f32 0.0, %v487
      %v489 = vpop.f32.mrb[0].mxu0
      %v490 = vpop.f32.mrb[0].mxu0
      %v491 = vadd.f32 0.0, %v490
      %v492 = vpop.f32.mrb[0].mxu0
      %493 = vdwg.mxu0
      %v494 = vld [vmem:[%s2] sm:$0x1]
      %v496 = vlaneseq
      %v497 = vshrl.u32 %v496, 7
      %v498 = vsub.s32 0, %v497
      %v499 = vrot.slane %v494, %v498
      %v501 = vmul.f32 %v392, %v499
      %v502 = vmul.f32 %v395, %v499
      %v503 = vmul.f32 %v400, %v499
      %v504 = vmul.f32 %v403, %v499
      %v505 = vmul.f32 %v408, %v499
      %v506 = vmul.f32 %v411, %v499
      %v507 = vmul.f32 %v416, %v499
      %v508 = vmul.f32 %v419, %v499
      %v509 = vmul.f32 %v424, %v499
      %v510 = vmul.f32 %v427, %v499
      %v511 = vmul.f32 %v432, %v499
      %v512 = vmul.f32 %v435, %v499
      %v513 = vmul.f32 %v440, %v499
      %v514 = vmul.f32 %v443, %v499
      %v515 = vmul.f32 %v448, %v499
      %v516 = vmul.f32 %v451, %v499
      %v517 = vmul.f32 %v456, %v499
      %v518 = vmul.f32 %v459, %v499
      %v519 = vmul.f32 %v464, %v499
      %v520 = vmul.f32 %v467, %v499
      %v521 = vmul.f32 %v472, %v499
      %v522 = vmul.f32 %v475, %v499
      %v523 = vmul.f32 %v480, %v499
      %v524 = vmul.f32 %v483, %v499
      %v525 = vmul.f32 %v488, %v499
      %v526 = vmul.f32 %v491, %v499
      %v527 = vld [vmem:[%s3] sm:$0x1]
      %v529 = vlaneseq
      %v530 = vshrl.u32 %v529, 7
      %v531 = vsub.s32 0, %v530
      %v532 = vrot.slane %v527, %v531
      %v534 = vadd.f32 %v501, %v532
      %v535 = vadd.f32 %v502, %v532
      %v536 = vadd.f32 %v503, %v532
      %v537 = vadd.f32 %v504, %v532
      %v538 = vadd.f32 %v505, %v532
      %v539 = vadd.f32 %v506, %v532
      %v540 = vadd.f32 %v507, %v532
      %v541 = vadd.f32 %v508, %v532
      %v542 = vadd.f32 %v509, %v532
      %v543 = vadd.f32 %v510, %v532
      %v544 = vadd.f32 %v511, %v532
      %v545 = vadd.f32 %v512, %v532
      %v546 = vadd.f32 %v513, %v532
      %v547 = vadd.f32 %v514, %v532
      %v548 = vadd.f32 %v515, %v532
      %v549 = vadd.f32 %v516, %v532
      %v550 = vadd.f32 %v517, %v532
      %v551 = vadd.f32 %v518, %v532
      %v552 = vadd.f32 %v519, %v532
      %v553 = vadd.f32 %v520, %v532
      %v554 = vadd.f32 %v521, %v532
      %v555 = vadd.f32 %v522, %v532
      %v556 = vadd.f32 %v523, %v532
      %v557 = vadd.f32 %v524, %v532
      %v558 = vadd.f32 %v525, %v532
      %v559 = vadd.f32 %v526, %v532
      %v560 = vmax.f32 %v534, 0.0
      %v561 = vmax.f32 %v535, 0.0
      %v562 = vmax.f32 %v536, 0.0
      %v563 = vmax.f32 %v537, 0.0
      %v564 = vmax.f32 %v538, 0.0
      %v565 = vmax.f32 %v539, 0.0
      %v566 = vmax.f32 %v540, 0.0
      %v567 = vmax.f32 %v541, 0.0
      %v568 = vmax.f32 %v542, 0.0
      %v569 = vmax.f32 %v543, 0.0
      %v570 = vmax.f32 %v544, 0.0
      %v571 = vmax.f32 %v545, 0.0
      %v572 = vmax.f32 %v546, 0.0
      %v573 = vmax.f32 %v547, 0.0
      %v574 = vmax.f32 %v548, 0.0
      %v575 = vmax.f32 %v549, 0.0
      %v576 = vmax.f32 %v550, 0.0
      %v577 = vmax.f32 %v551, 0.0
      %v578 = vmax.f32 %v552, 0.0
      %v579 = vmax.f32 %v553, 0.0
      %v580 = vmax.f32 %v554, 0.0
      %v581 = vmax.f32 %v555, 0.0
      %v582 = vmax.f32 %v556, 0.0
      %v583 = vmax.f32 %v557, 0.0
      %v584 = vmax.f32 %v558, 0.0
      %v585 = vmax.f32 %v559, 0.0
      %v586 = vpack.c.bf16 %v561, %v560
      %v587 = vpack.c.bf16 %v563, %v562
      %v588 = vpack.c.bf16 %v565, %v564
      %v589 = vpack.c.bf16 %v567, %v566
      %v590 = vpack.c.bf16 %v569, %v568
      %v591 = vpack.c.bf16 %v571, %v570
      %v592 = vpack.c.bf16 %v573, %v572
      %v593 = vpack.c.bf16 %v575, %v574
      %v594 = vpack.c.bf16 %v577, %v576
      %v595 = vpack.c.bf16 %v579, %v578
      %v596 = vpack.c.bf16 %v581, %v580
      %v597 = vpack.c.bf16 %v583, %v582
      %v598 = vpack.c.bf16 %v585, %v584
      %v612 = vunpack.c.l.b16 %v586
      %v613 = vunpack.c.h.b16 %v586
      %v614 = vunpack.c.l.b16 %v587
      %v615 = vunpack.c.h.b16 %v587
      %v616 = vunpack.c.l.b16 %v588
      %v617 = vunpack.c.h.b16 %v588
      %v618 = vunpack.c.l.b16 %v589
      %v619 = vunpack.c.h.b16 %v589
      %v620 = vunpack.c.l.b16 %v590
      %v621 = vunpack.c.h.b16 %v590
      %v622 = vunpack.c.l.b16 %v591
      %v623 = vunpack.c.h.b16 %v591
      %v624 = vunpack.c.l.b16 %v592
      %v625 = vunpack.c.h.b16 %v592
      %v626 = vunpack.c.l.b16 %v593
      %v627 = vunpack.c.h.b16 %v593
      %v628 = vunpack.c.l.b16 %v594
      %v629 = vunpack.c.h.b16 %v594
      %v630 = vunpack.c.l.b16 %v595
      %v631 = vunpack.c.h.b16 %v595
      %v632 = vunpack.c.l.b16 %v596
      %v633 = vunpack.c.h.b16 %v596
      %v634 = vunpack.c.l.b16 %v597
      %v635 = vunpack.c.h.b16 %v597
      %v636 = vunpack.c.l.b16 %v598
      %v637 = vunpack.c.h.b16 %v598
      %v638 = vpack.c.b16 %v612, %v612
      %v639 = vpack.c.b16 %v613, %v613
      %v640 = vpack.c.b16 %v614, %v614
      %v641 = vpack.c.b16 %v615, %v615
      %v642 = vpack.c.b16 %v616, %v616
      %v643 = vpack.c.b16 %v617, %v617
      %v644 = vpack.c.b16 %v618, %v618
      %v645 = vpack.c.b16 %v619, %v619
      %v646 = vpack.c.b16 %v620, %v620
      %v647 = vpack.c.b16 %v621, %v621
      %v648 = vpack.c.b16 %v622, %v622
      %v649 = vpack.c.b16 %v623, %v623
      %v650 = vpack.c.b16 %v624, %v624
      %v651 = vpack.c.b16 %v625, %v625
      %v652 = vpack.c.b16 %v626, %v626
      %v653 = vpack.c.b16 %v627, %v627
      %v654 = vpack.c.b16 %v628, %v628
      %v655 = vpack.c.b16 %v629, %v629
      %v656 = vpack.c.b16 %v630, %v630
      %v657 = vpack.c.b16 %v631, %v631
      %v658 = vpack.c.b16 %v632, %v632
      %v659 = vpack.c.b16 %v633, %v633
      %v660 = vpack.c.b16 %v634, %v634
      %v661 = vpack.c.b16 %v635, %v635
      %v662 = vpack.c.b16 %v636, %v636
      %v663 = vpack.c.b16 %v637, %v637
      %690 = vst [vmem:[%s199] sm:$0xf] %v638
      %691 = vst [vmem:[%s199 + $0x4] sm:$0xf] %v639
      %692 = vst [vmem:[%s199 + $0x8] sm:$0xf] %v640
      %693 = vst [vmem:[%s199 + $0xc] sm:$0xf] %v641
      %694 = vst [vmem:[%s199 + $0x10] sm:$0xf] %v642
      %695 = vst [vmem:[%s199 + $0x14] sm:$0xf] %v643
      %696 = vst [vmem:[%s199 + $0x18] sm:$0xf] %v644
      %697 = vst [vmem:[%s199 + $0x1c] sm:$0xf] %v645
      %698 = vst [vmem:[%s199 + $0x20] sm:$0xf] %v646
      %699 = vst [vmem:[%s199 + $0x24] sm:$0xf] %v647
      %700 = vst [vmem:[%s199 + $0x28] sm:$0xf] %v648
      %701 = vst [vmem:[%s199 + $0x2c] sm:$0xf] %v649
      %702 = vst [vmem:[%s199 + $0x30] sm:$0xf] %v650
      %703 = vst [vmem:[%s199 + $0x34] sm:$0xf] %v651
      %704 = vst [vmem:[%s199 + $0x38] sm:$0xf] %v652
      %705 = vst [vmem:[%s199 + $0x3c] sm:$0xf] %v653
      %706 = vst [vmem:[%s199 + $0x40] sm:$0xf] %v654
      %707 = vst [vmem:[%s199 + $0x44] sm:$0xf] %v655
      %708 = vst [vmem:[%s199 + $0x48] sm:$0xf] %v656
      %709 = vst [vmem:[%s199 + $0x4c] sm:$0xf] %v657
      %710 = vst [vmem:[%s199 + $0x50] sm:$0xf] %v658
      %711 = vst [vmem:[%s199 + $0x54] sm:$0xf] %v659
      %712 = vst [vmem:[%s199 + $0x58] sm:$0xf] %v660
      %713 = vst [vmem:[%s199 + $0x5c] sm:$0xf] %v661
      %714 = vst [vmem:[%s199 + $0x60] sm:$0xf] %v662
      %715 = vst [vmem:[%s199 + $0x64] sm:$0xf] %v663
      %s716 = smul.u32 26, %s15
      %p717 = scmp.lt.s32.totalorder %s716, 51
      %s718 = scalar_select %p717, %s716, 51
      %s719 = smul.addr %s718, 4
      %s720 = scalar_lea.vmem %s4, %s719
      // Predicated region
      $region37: #{conv_block_forward.3} parent=35 // pred_check
        %p721 = pneg %p122
      $region38: #{conv_block_forward.3} parent=35 // pred_check_branch
        %723 = sbr.rel (%p721) target = $region40
      $region39: #{conv_block_forward.3} parent=35 // pred_region
        %s724 = smul.u32 26, %s15
      $region40: #{conv_block_forward.3} parent=35 // pred_fallthru
        _
    $region36: #{conv_block_forward.3} parent=5 // pred_fallthru
      _
    %p725 = scmp.le.s32.totalorder 2, %s10
    // Predicated region
    $region41: #{conv_block_forward.3} parent=5 // pred_check
      %p726 = pneg %p725
    $region42: #{conv_block_forward.3} parent=5 // pred_check_branch
      %728 = sbr.rel (%p726) target = $region44
    $region43: #{conv_block_forward.3} parent=5 // pred_region
      %s729 = ssub.s32 %s10, 2
      // Predicated region
      $region45: #{conv_block_forward.3} parent=43 // pred_check
        %p730 = pneg %p128
      $region46: #{conv_block_forward.3} parent=43 // pred_check_branch
        %732 = sbr.rel (%p730) target = $region48
      $region47: #{conv_block_forward.3} parent=43 // pred_region
        %s733 = smul.u32 26, %s16
        %p734 = scmp.lt.s32.totalorder %s733, 51
        %s735 = scalar_select %p734, %s733, 51
        %s736 = smul.addr %s735, 4
        %s737 = scalar_lea.vmem %s4, %s736
      $region48: #{conv_block_forward.3} parent=43 // pred_fallthru
        _
    $region44: #{conv_block_forward.3} parent=5 // pred_fallthru
      _
  $region6: #{conv_block_forward.3} parent=0 // loop_footer
    %s14 = sadd.s32 1, %s10
  $region7: #{conv_block_forward.3} parent=0 // loop_footer_branch
    %9 = sbr.rel target = $region3
  $region8: #{conv_block_forward.3} parent=0 // loop_exit
    _

</llo_original>
